<compile_context>
chip_gen: v5e
topology: v5e:2x2
jax: 0.10.0
libtpu: 0.0.40
codegen_flags: <defaults>
</compile_context>

<pallas_src>
import jax
import jax.numpy as jnp
from jax import lax
from jax.experimental import pallas as pl
from jax.experimental.pallas import tpu as pltpu

OFFSET_MARGIN = 1000.0  # SpanPredictionModel.offset_margin


# --------------------------------------------------------------------------
# Tiling helpers
# --------------------------------------------------------------------------
def _vmem_budget_and_limit():
    """Chip-aware VMEM budget for pallas-managed buffers + scoped limit."""
    cap = 64 * 1024 * 1024  # conservative default: v7x per-TC VMEM
    try:
        info = pltpu.get_tpu_info()
        cap = int(getattr(info, "vmem_capacity_bytes", cap)) or cap
    except Exception:
        pass
    budget = int(cap * 0.60)                       # pallas buffers target
    limit = min(int(cap * 0.85), budget + (16 << 20))  # leave Mosaic headroom
    return budget, limit


def _divisors(n):
    return [d for d in range(1, n + 1) if n % d == 0]


def _pick_batch_tile(batch, bytes_per_row, budget):
    """Largest legal batch tile whose pipelined footprint fits the budget.

    Legal = divisor of `batch` that is a multiple of 8 (sublane rule on the
    [tb, S] blocks) or the full batch.  Prefers tiles that give >= 2 grid
    steps so the "parallel" batch axis can be split across TensorCores.
    """
    legal = [d for d in _divisors(batch) if (d % 8 == 0) or (d == batch)]
    valid = [d for d in legal if d * bytes_per_row <= budget]
    multi = [d for d in valid if batch // d >= 2]
    if multi:
        return max(multi)
    if valid:
        return max(valid)
    # Nothing fits the budget: best effort, take the smallest legal tile.
    return min(legal)


# --------------------------------------------------------------------------
# Pass 1: TokenClassificationHead (Linear(H, 2)) + per-tile max/min partials
# --------------------------------------------------------------------------
def span_head_kernel(x_ref, w_ref, b_ref, raw_ref, pmax_ref, pmin_ref):
    """x_ref:  [TB, S, H] encoder-native dtype, streamed batch tile
       w_ref:  [2, H]     classifier weight (torch layout), resident
       b_ref:  [1, 2]     f32 classifier bias, resident
       raw_ref:[2, TB, S] f32 raw per-label logits (lane-dense on S)
       pmax/pmin: [1,1,1] f32 per-tile max / min of the raw logits
    """
    x = x_ref[...]                                  # native dtype, no up-cast
    w = w_ref[...]                                  # [2, H] same dtype as x
    bias = b_ref[...]                               # [1, 2] f32

    def label_logits(c):
        prod = x * w[c:c + 1, :]                    # VPU multiply, native dtype
        if prod.dtype != jnp.float32:
            prod = prod.astype(jnp.float32)         # accumulate H-sum in f32
        return jnp.sum(prod, axis=-1) + bias[:, c:c + 1]   # [TB, S] f32

    l0 = label_logits(0)
    l1 = label_logits(1)
    raw_ref[0, :, :] = l0
    raw_ref[1, :, :] = l1

    hi = jnp.max(jnp.maximum(l0, l1), axis=(0, 1), keepdims=True)   # [1, 1]
    lo = jnp.min(jnp.minimum(l0, l1), axis=(0, 1), keepdims=True)   # [1, 1]
    pmax_ref[...] = hi.reshape(1, 1, 1)
    pmin_ref[...] = lo.reshape(1, 1, 1)


# --------------------------------------------------------------------------
# Pass 2: selection-mask offset add + per-tile cross-entropy partial sum
# --------------------------------------------------------------------------
def offset_loss_kernel(raw_ref, mask_ref, gt_ref, off_ref, out_ref, ploss_ref):
    """raw_ref: [2, TB, S] f32 raw per-label logits
       mask:    [TB, S]    f32 selection_token_mask
       gt:      [TB, 2]    i32 gold span (start, end) indices
       off:     [1]        f32 SMEM scalar: logits.max()-logits.min()+margin
       out:     [2, TB, S] f32 offset-adjusted per-label logits
       ploss:   [1, 1, 1]  f32 per-tile sum of CE terms (logsumexp - gathered)
    """
    off = off_ref[0]
    om = off * mask_ref[...]                        # computed once, reused
    lg0 = raw_ref[0, :, :] + om                     # [TB, S]
    lg1 = raw_ref[1, :, :] + om
    out_ref[0, :, :] = lg0
    out_ref[1, :, :] = lg1

    tb, s = om.shape
    pos = lax.broadcasted_iota(jnp.int32, (tb, s), 1)   # hoisted, shared
    gt = gt_ref[...]                                     # [TB, 2]

    def ce_terms(lg, tgt):                               # lg [TB,S], tgt [TB,1]
        m = jnp.max(lg, axis=-1, keepdims=True)
        lse = m + jnp.log(jnp.sum(jnp.exp(lg - m), axis=-1, keepdims=True))
        gathered = jnp.sum(jnp.where(pos == tgt, lg, 0.0),
                           axis=-1, keepdims=True)
        return lse - gathered                            # [TB, 1]

    terms = ce_terms(lg0, gt[:, 0:1]) + ce_terms(lg1, gt[:, 1:2])
    ploss_ref[...] = jnp.sum(terms, axis=(0, 1), keepdims=True).reshape(1, 1, 1)


# --------------------------------------------------------------------------
# Parameters & wrapper
# --------------------------------------------------------------------------
def init_params(key, hidden_size, num_labels=2):
    k_w, k_b = jax.random.split(key)
    scale = 1.0 / jnp.sqrt(hidden_size)
    return {
        # jiant TokenClassificationHead.classifier : nn.Linear(H, num_labels),
        # weight kept in the torch [out_features, in_features] layout.
        "w_cls": jax.random.normal(k_w, (num_labels, hidden_size),
                                   jnp.float32) * scale,
        "b_cls": jax.random.normal(k_b, (1, num_labels), jnp.float32) * scale,
    }


def span_prediction_forward(unpooled, params, selection_token_mask,
                            gt_span_idxs):
    """unpooled: [B,S,H] encoder last hidden states; mask: [B,S]; gt: [B,2]."""
    B, S, H = unpooled.shape

    # Stream the encoder-native dtype; do NOT insert a wrapper-side cast (an
    # unfused XLA convert would be an extra full HBM pass over [B,S,H]).
    x = unpooled
    itemsize = jnp.dtype(x.dtype).itemsize
    w = params["w_cls"].astype(x.dtype)              # tiny resident weight
    b = params["b_cls"].astype(jnp.float32).reshape(1, 2)
    mask = selection_token_mask.astype(jnp.float32)
    gt = gt_span_idxs.astype(jnp.int32)

    budget, vmem_limit = _vmem_budget_and_limit()
    cparams = pltpu.CompilerParams(
        dimension_semantics=("parallel",),           # batch tiles across TCs
        vmem_limit_bytes=vmem_limit)

    # ---- pass 1: classification head + per-tile max/min partials ----
    # Footprint per batch row: double-buffered input block + one f32 working
    # copy of the tile + double-buffered packed raw-logit output block.
    row1 = 2 * S * H * itemsize + S * H * 4 + 2 * (2 * S * 4)
    tb1 = _pick_batch_tile(B, row1, budget)
    nt1 = B // tb1

    head_cost = pl.CostEstimate(
        flops=4 * B * S * H,
        transcendentals=0,
        bytes_accessed=B * S * H * itemsize + 2 * H * itemsize
        + 2 * B * S * 4 + 8 * nt1)

    raw, pmax, pmin = pl.pallas_call(
        span_head_kernel,
        grid=(nt1,),
        in_specs=[
            pl.BlockSpec((tb1, S, H), lambda i: (i, 0, 0)),   # streamed tiles
            pl.BlockSpec((2, H), lambda i: (0, 0)),           # resident weight
            pl.BlockSpec((1, 2), lambda i: (0, 0)),           # resident bias
        ],
        out_specs=(
            pl.BlockSpec((2, tb1, S), lambda i: (0, i, 0)),   # packed logits
            pl.BlockSpec((1, 1, 1), lambda i: (i, 0, 0)),     # per-tile max
            pl.BlockSpec((1, 1, 1), lambda i: (i, 0, 0)),     # per-tile min
        ),
        out_shape=(
            jax.ShapeDtypeStruct((2, B, S), jnp.float32),
            jax.ShapeDtypeStruct((nt1, 1, 1), jnp.float32),
            jax.ShapeDtypeStruct((nt1, 1, 1), jnp.float32),
        ),
        compiler_params=cparams,
        cost_estimate=head_cost,
    )(x, w, b)

    # Tiny wrapper glue: finish the global max/min reduction -> offset scalar.
    offset = (jnp.max(pmax) - jnp.min(pmin) + OFFSET_MARGIN)
    offset = offset.astype(jnp.float32).reshape(1)

    # ---- pass 2: offset add + cross-entropy-over-sequence partial loss ----
    # Much smaller per-row footprint, so it gets its own (fatter) batch tile.
    row2 = 2 * (2 * S * 4 + S * 4 + 8 + 2 * S * 4) + 8 * S * 4
    tb2 = _pick_batch_tile(B, row2, budget)
    nt2 = B // tb2

    loss_cost = pl.CostEstimate(
        flops=16 * B * S,
        transcendentals=2 * B * S + 2 * B,
        bytes_accessed=5 * B * S * 4 + B * 2 * 4 + 4 * nt2)

    out, ploss = pl.pallas_call(
        offset_loss_kernel,
        grid=(nt2,),
        in_specs=[
            pl.BlockSpec((2, tb2, S), lambda i: (0, i, 0)),
            pl.BlockSpec((tb2, S), lambda i: (i, 0)),
            pl.BlockSpec((tb2, 2), lambda i: (i, 0)),
            pl.BlockSpec(memory_space=pltpu.MemorySpace.SMEM),  # offset scalar
        ],
        out_specs=(
            pl.BlockSpec((2, tb2, S), lambda i: (0, i, 0)),
            pl.BlockSpec((1, 1, 1), lambda i: (i, 0, 0)),       # per-tile CE
        ),
        out_shape=(
            jax.ShapeDtypeStruct((2, B, S), jnp.float32),
            jax.ShapeDtypeStruct((nt2, 1, 1), jnp.float32),
        ),
        compiler_params=cparams,
        cost_estimate=loss_cost,
    )(raw, mask, gt, offset)

    # Layout plumbing only: lane-dense [2, B, S] slabs -> torch [B, S, 2]
    # logits layout (kept to match the reference module's output contract).
    logits = jnp.transpose(out, (1, 2, 0))
    loss = jnp.sum(ploss) / jnp.float32(2 * B)   # CrossEntropyLoss mean over 2B
    return logits, loss


if __name__ == "__main__":
    B, S, H = 2, 8, 32  # batch, seq len, hidden size

    key = jax.random.PRNGKey(0)
    k_hidden, k_mask, k_gt, k_params = jax.random.split(key, 4)

    # Stand-in for the encoder's unpooled (last hidden state) output.
    unpooled = jax.random.normal(k_hidden, (B, S, H), jnp.float32)
    selection_token_mask = jax.random.bernoulli(
        k_mask, 0.5, (B, S)).astype(jnp.float32)
    gt_span_idxs = jax.random.randint(k_gt, (B, 2), 0, S, jnp.int32)
    params = init_params(k_params, H)

    logits, loss = span_prediction_forward(unpooled, params,
                                           selection_token_mask, gt_span_idxs)
    jax.block_until_ready((logits, loss))

    assert logits.shape == (B, S, 2)
    assert loss.shape == ()
    assert bool(jnp.all(jnp.isfinite(logits))) and bool(jnp.isfinite(loss))
    print("KERNEL_OK")
</pallas_src>

<mosaic_0001>
module attributes {stable_mosaic.version = 11 : i64} {
  func.func @span_head_kernel(%arg0: i32, %arg1: memref<2x8x32xf32, #tpu.memory_space<vmem>>, %arg2: memref<2x32xf32, #tpu.memory_space<vmem>>, %arg3: memref<1x2xf32, #tpu.memory_space<vmem>>, %arg4: memref<2x2x8xf32, #tpu.memory_space<vmem>>, %arg5: memref<1x1x1xf32, #tpu.memory_space<vmem>>, %arg6: memref<1x1x1xf32, #tpu.memory_space<vmem>>) attributes {dimension_semantics = [#tpu.dimension_semantics<parallel>], iteration_bounds = array<i64: 1>, scalar_prefetch = 0 : i64, scratch_operands = 0 : i64, tpu.core_type = #tpu.core_type<tc>, window_params = [{transform_indices = @transform_0, window_bounds = array<i64: 2, 8, 32>}, {pipeline_mode = #tpu.pipeline_mode<synchronous>, transform_indices = @transform_1, window_bounds = array<i64: 2, 32>}, {pipeline_mode = #tpu.pipeline_mode<synchronous>, transform_indices = @transform_2, window_bounds = array<i64: 1, 2>}, {transform_indices = @transform_3, window_bounds = array<i64: 2, 2, 8>}, {transform_indices = @transform_4, window_bounds = array<i64: 1, 1, 1>}, {transform_indices = @transform_5, window_bounds = array<i64: 1, 1, 1>}]} {
    %c0 = arith.constant 0 : index
    %c0_0 = arith.constant 0 : index
    %c0_1 = arith.constant 0 : index
    %0 = vector.load %arg1[%c0, %c0_0, %c0_1] : memref<2x8x32xf32, #tpu.memory_space<vmem>>, vector<2x8x32xf32>
    %c0_2 = arith.constant 0 : index
    %c0_3 = arith.constant 0 : index
    %1 = vector.load %arg2[%c0_2, %c0_3] : memref<2x32xf32, #tpu.memory_space<vmem>>, vector<2x32xf32>
    %c0_4 = arith.constant 0 : index
    %c0_5 = arith.constant 0 : index
    %2 = vector.load %arg3[%c0_4, %c0_5] : memref<1x2xf32, #tpu.memory_space<vmem>>, vector<1x2xf32>
    %3 = vector.extract_strided_slice %1 {offsets = [0, 0], sizes = [1, 32], strides = [1, 1]} : vector<2x32xf32> to vector<1x32xf32>
    %4 = vector.shape_cast %3 : vector<1x32xf32> to vector<1x1x32xf32>
    %5 = vector.broadcast %4 : vector<1x1x32xf32> to vector<2x8x32xf32>
    %6 = arith.mulf %0, %5 : vector<2x8x32xf32>
    %cst = arith.constant dense<0.000000e+00> : vector<2x8xf32>
    %7 = vector.multi_reduction <add>, %6, %cst [2] : vector<2x8x32xf32> to vector<2x8xf32>
    %8 = vector.extract_strided_slice %2 {offsets = [0, 0], sizes = [1, 1], strides = [1, 1]} : vector<1x2xf32> to vector<1x1xf32>
    %9 = vector.broadcast %8 : vector<1x1xf32> to vector<2x8xf32>
    %10 = arith.addf %7, %9 : vector<2x8xf32>
    %11 = vector.extract_strided_slice %1 {offsets = [1, 0], sizes = [1, 32], strides = [1, 1]} : vector<2x32xf32> to vector<1x32xf32>
    %12 = vector.shape_cast %11 : vector<1x32xf32> to vector<1x1x32xf32>
    %13 = vector.broadcast %12 : vector<1x1x32xf32> to vector<2x8x32xf32>
    %14 = arith.mulf %0, %13 : vector<2x8x32xf32>
    %cst_6 = arith.constant dense<0.000000e+00> : vector<2x8xf32>
    %15 = vector.multi_reduction <add>, %14, %cst_6 [2] : vector<2x8x32xf32> to vector<2x8xf32>
    %16 = vector.extract_strided_slice %2 {offsets = [0, 1], sizes = [1, 1], strides = [1, 1]} : vector<1x2xf32> to vector<1x1xf32>
    %17 = vector.broadcast %16 : vector<1x1xf32> to vector<2x8xf32>
    %18 = arith.addf %15, %17 : vector<2x8xf32>
    %c0_7 = arith.constant 0 : index
    %c0_8 = arith.constant 0 : index
    %c0_9 = arith.constant 0 : index
    %19 = vector.load %arg4[%c0_7, %c0_8, %c0_9] : memref<2x2x8xf32, #tpu.memory_space<vmem>>, vector<1x2x8xf32>
    %20 = vector.shape_cast %19 : vector<1x2x8xf32> to vector<2x8xf32>
    %21 = vector.shape_cast %10 : vector<2x8xf32> to vector<1x2x8xf32>
    tpu.vector_store %arg4[%c0_7, %c0_8, %c0_9], %21 {strides = array<i32>} : memref<2x2x8xf32, #tpu.memory_space<vmem>>, vector<1x2x8xf32>,
    %c1 = arith.constant 1 : index
    %c0_10 = arith.constant 0 : index
    %c0_11 = arith.constant 0 : index
    %22 = vector.load %arg4[%c1, %c0_10, %c0_11] : memref<2x2x8xf32, #tpu.memory_space<vmem>>, vector<1x2x8xf32>
    %23 = vector.shape_cast %22 : vector<1x2x8xf32> to vector<2x8xf32>
    %24 = vector.shape_cast %18 : vector<2x8xf32> to vector<1x2x8xf32>
    tpu.vector_store %arg4[%c1, %c0_10, %c0_11], %24 {strides = array<i32>} : memref<2x2x8xf32, #tpu.memory_space<vmem>>, vector<1x2x8xf32>,
    %25 = arith.maximumf %10, %18 : vector<2x8xf32>
    %26 = vector.shape_cast %25 : vector<2x8xf32> to vector<1x2x8xf32>
    %cst_12 = arith.constant dense<0xFF800000> : vector<1xf32>
    %27 = vector.multi_reduction <maximumf>, %26, %cst_12 [1, 2] : vector<1x2x8xf32> to vector<1xf32>
    %28 = vector.shape_cast %27 : vector<1xf32> to vector<1x1x1xf32>
    %29 = vector.extract %28[0, 0, 0] : f32 from vector<1x1x1xf32>
    %30 = vector.broadcast %29 : f32 to vector<1x1xf32>
    %31 = arith.minimumf %10, %18 : vector<2x8xf32>
    %32 = vector.shape_cast %31 : vector<2x8xf32> to vector<1x2x8xf32>
    %cst_13 = arith.constant dense<0x7F800000> : vector<1xf32>
    %33 = vector.multi_reduction <minimumf>, %32, %cst_13 [1, 2] : vector<1x2x8xf32> to vector<1xf32>
    %34 = vector.shape_cast %33 : vector<1xf32> to vector<1x1x1xf32>
    %35 = vector.extract %34[0, 0, 0] : f32 from vector<1x1x1xf32>
    %36 = vector.broadcast %35 : f32 to vector<1x1xf32>
    %37 = vector.shape_cast %30 : vector<1x1xf32> to vector<1x1x1xf32>
    %c0_14 = arith.constant 0 : index
    %c0_15 = arith.constant 0 : index
    %c0_16 = arith.constant 0 : index
    %38 = vector.load %arg5[%c0_14, %c0_15, %c0_16] : memref<1x1x1xf32, #tpu.memory_space<vmem>>, vector<1x1x1xf32>
    tpu.vector_store %arg5[%c0_14, %c0_15, %c0_16], %37 {strides = array<i32>} : memref<1x1x1xf32, #tpu.memory_space<vmem>>, vector<1x1x1xf32>,
    %39 = vector.shape_cast %36 : vector<1x1xf32> to vector<1x1x1xf32>
    %c0_17 = arith.constant 0 : index
    %c0_18 = arith.constant 0 : index
    %c0_19 = arith.constant 0 : index
    %40 = vector.load %arg6[%c0_17, %c0_18, %c0_19] : memref<1x1x1xf32, #tpu.memory_space<vmem>>, vector<1x1x1xf32>
    tpu.vector_store %arg6[%c0_17, %c0_18, %c0_19], %39 {strides = array<i32>} : memref<1x1x1xf32, #tpu.memory_space<vmem>>, vector<1x1x1xf32>,
    return
  }
  func.func @transform_0(%arg0: i32) -> (i32, i32, i32) {
    %c0_i32 = arith.constant 0 : i32
    %c0_i32_0 = arith.constant 0 : i32
    %c0_i32_1 = arith.constant 0 : i32
    return %arg0, %c0_i32, %c0_i32_0 : i32, i32, i32
  }
  func.func @transform_1(%arg0: i32) -> (i32, i32) {
    %c0_i32 = arith.constant 0 : i32
    %c0_i32_0 = arith.constant 0 : i32
    %c0_i32_1 = arith.constant 0 : i32
    return %c0_i32, %c0_i32_0 : i32, i32
  }
  func.func @transform_2(%arg0: i32) -> (i32, i32) {
    %c0_i32 = arith.constant 0 : i32
    %c0_i32_0 = arith.constant 0 : i32
    %c0_i32_1 = arith.constant 0 : i32
    return %c0_i32, %c0_i32_0 : i32, i32
  }
  func.func @transform_3(%arg0: i32) -> (i32, i32, i32) {
    %c0_i32 = arith.constant 0 : i32
    %c0_i32_0 = arith.constant 0 : i32
    %c0_i32_1 = arith.constant 0 : i32
    return %c0_i32, %arg0, %c0_i32_0 : i32, i32, i32
  }
  func.func @transform_4(%arg0: i32) -> (i32, i32, i32) {
    %c0_i32 = arith.constant 0 : i32
    %c0_i32_0 = arith.constant 0 : i32
    %c0_i32_1 = arith.constant 0 : i32
    return %arg0, %c0_i32, %c0_i32_0 : i32, i32, i32
  }
  func.func @transform_5(%arg0: i32) -> (i32, i32, i32) {
    %c0_i32 = arith.constant 0 : i32
    %c0_i32_0 = arith.constant 0 : i32
    %c0_i32_1 = arith.constant 0 : i32
    return %arg0, %c0_i32, %c0_i32_0 : i32, i32, i32
  }
}

</mosaic_0001>

<llo_original>
// kernel: tpu_custom_call.1
$region0: #{tpu_custom_call.1}
  #allocation0 [shape = 'u32[]', space=smem, size = 0x4, offset = 0x4, fixed_abs, tag = 'smem constant byte address 0x4 - core index']
  #allocation1 [shape = 'u32[72,128]{1,0:T(1,128)}', space=vmem, size = 0x9000, scoped, tag = 'internal scratch']
  %s0 = inlined_call_operand.hbm [shape: f32[2,8,32], index: 0, kind: input, shape index: {}]
  %s1 = inlined_call_operand.hbm [shape: f32[2,32], index: 1, kind: input, shape index: {}]
  %s2 = inlined_call_operand.vmem [shape: f32[1,2], index: 2, kind: input, shape index: {}]
  %s3 = inlined_call_operand.hbm [shape: f32[2,2,8], index: 3, kind: output, shape index: {0}]
  %s4 = inlined_call_operand.hbm [shape: f32[1,1,1], index: 4, kind: output, shape index: {1}]
  %s5 = inlined_call_operand.hbm [shape: f32[1,1,1], index: 5, kind: output, shape index: {2}]
  %6 = xla_tuple %s3, %s4, %s5
  %s7 = sld [smem:[#allocation0]]
  $region46: #{tpu_custom_call.1} parent=0
    _
  %s9 = ssub.s32 1, %s7
  %s10 = scalar_select 0, %s9, %s7
  $region1: #{tpu_custom_call.1} parent=0
    #allocation2 [shape = 'u8[8192]{0}', space=vmem, size = 0x2000, scoped, tag = 'input window, operand 0, single buffered']
    #allocation3 [shape = 's32[1]{0}', space=sflag, size = 0x4, scoped, tag = 'scoped memory for tpu_custom_call.1']
    #allocation4 [shape = 's32[1]{0}', space=sflag, size = 0x4, scoped, tag = 'scoped memory for tpu_custom_call.1']
    #allocation5 [shape = 'u8[1024]{0}', space=vmem, size = 0x400, scoped, tag = 'input window, operand 1, single buffered']
    #allocation6 [shape = 's32[1]{0}', space=sflag, size = 0x4, scoped, tag = 'scoped memory for tpu_custom_call.1']
    #allocation7 [shape = 'u8[2048]{0}', space=vmem, size = 0x800, scoped, tag = 'output window, operand 0, single buffered']
    #allocation8 [shape = 'u8[512]{0}', space=vmem, size = 0x400, scoped, tag = 'output window, operand 1, single buffered']
    #allocation9 [shape = 's32[1]{0}', space=sflag, size = 0x4, scoped, tag = 'scoped memory for tpu_custom_call.1']
    #allocation10 [shape = 'u8[512]{0}', space=vmem, size = 0x400, scoped, tag = 'output window, operand 2, single buffered']
    %11 = vsyncpa [#allocation3], 0
    %12 = vsyncpa [#allocation6], 0
    %13 = vsyncpa [#allocation4], 0
    %14 = vsyncpa [#allocation9], 0
    // Predicated region
    $region2: #{tpu_custom_call.1} parent=1 // pred_check
      _
    $region3: #{tpu_custom_call.1} parent=1 // pred_check_branch
      %16 = sbr.rel (0) target = $region5
    $region4: #{tpu_custom_call.1} parent=1 // pred_region
      %18 = vsyncadd [#allocation3], 0
      %s19 = sshll.u32 %s0, 4
      %s20 = int_to_ptr.hbm [resolvable:$true] %s19
      %s21 = sshll.u32 [#allocation2], 4
      %s22 = int_to_ptr.vmem [resolvable:$true] %s21
      %27 = dma.hbm_to_vmem [thread:$0]  %s20, 256, %s22, [#allocation3], 128, 128, 8
    $region5: #{tpu_custom_call.1} parent=1 // pred_fallthru
      _
    // Predicated region
    $region6: #{tpu_custom_call.1} parent=1 // pred_check
      _
    $region7: #{tpu_custom_call.1} parent=1 // pred_check_branch
      %29 = sbr.rel (0) target = $region9
    $region8: #{tpu_custom_call.1} parent=1 // pred_region
      %31 = vsyncadd [#allocation6], 0
      %s33 = sshll.u32 %s1, 4
      %s34 = int_to_ptr.hbm [resolvable:$true] %s33
      %s35 = sshll.u32 [#allocation5], 4
      %s36 = int_to_ptr.vmem [resolvable:$true] %s35
      %38 = dma.hbm_to_vmem [thread:$0]  %s34, 32, %s36, [#allocation6]
    $region9: #{tpu_custom_call.1} parent=1 // pred_fallthru
      _
    // Predicated region
    $region10: #{tpu_custom_call.1} parent=1 // pred_check
      _
    $region11: #{tpu_custom_call.1} parent=1 // pred_check_branch
      %40 = sbr.rel (0) target = $region13
    $region12: #{tpu_custom_call.1} parent=1 // pred_region
      _
    $region13: #{tpu_custom_call.1} parent=1 // pred_fallthru
      _
    // Predicated region
    $region14: #{tpu_custom_call.1} parent=1 // pred_check
      _
    $region15: #{tpu_custom_call.1} parent=1 // pred_check_branch
      %42 = sbr.rel (0) target = $region17
    $region16: #{tpu_custom_call.1} parent=1 // pred_region
      %44 = dma.done [#allocation3], 256
    $region17: #{tpu_custom_call.1} parent=1 // pred_fallthru
      _
    // Predicated region
    $region18: #{tpu_custom_call.1} parent=1 // pred_check
      _
    $region19: #{tpu_custom_call.1} parent=1 // pred_check_branch
      %46 = sbr.rel (0) target = $region21
    $region20: #{tpu_custom_call.1} parent=1 // pred_region
      %48 = dma.done [#allocation6], 32
    $region21: #{tpu_custom_call.1} parent=1 // pred_fallthru
      _
    %v49 = vld [vmem:[#allocation2] sm:$0xff]
    %v50 = vld [vmem:[#allocation2 + $0x8] sm:$0xff]
    %v51 = vld [vmem:[#allocation5] sm:$0x3]
    %v52 = vld [vmem:[%s2] sm:$0x1]
    %v53 = vperm.slane %v51, 0
    %v54 = vmul.f32 %v49, %v53
    %v55 = vmul.f32 %v50, %v53
    %vm56 = vcmask 261120
    %v57 = vsel %vm56, %v54, 0.0
    %58 = vadd.xlane.f32.xlu0 %v57
    %v59 = vpop.xlane.xlu0 %58
    %v60 = vsel %vm56, %v55, 0.0
    %61 = vadd.xlane.f32.xlu0 %v60
    %v62 = vpop.xlane.xlu0 %61
    %v64 = vperm.slane %v52, 0
    %65 = vset.pattern.permute.xlu0 0
    %66 = vperm.xlu0 %65, %v64
    %v67 = vpop.permute.xlu0 %66
    %v69 = vadd.f32 %v59, %v67
    %v70 = vadd.f32 %v62, %v67
    %v71 = vperm.slane %v51, 1
    %v72 = vmul.f32 %v49, %v71
    %v73 = vmul.f32 %v50, %v71
    %v74 = vsel %vm56, %v72, 0.0
    %75 = vadd.xlane.f32.xlu0 %v74
    %v76 = vpop.xlane.xlu0 %75
    %v77 = vsel %vm56, %v73, 0.0
    %78 = vadd.xlane.f32.xlu0 %v77
    %v79 = vpop.xlane.xlu0 %78
    %80 = vset.pattern.permute.xlu0 1
    %81 = vperm.xlu0 %80, %v64
    %v82 = vpop.permute.xlu0 %81
    %v84 = vadd.f32 %v76, %v82
    %v85 = vadd.f32 %v79, %v82
    %v88 = vlaneseq
    %v89 = vand.u32 %v88, 127
    %v90 = vperm.slane %v69, %v89
    %v91 = vperm.slane %v70, %v89
    %vm92 = vcmask 1041409
    %v93 = vsel %vm92, %v91, %v90
    %vm95 = vcmask 58368
    %96 = vst.msk [vmem:[#allocation7] sm:$0x3] %vm95, %v93
    %v99 = vperm.slane %v84, %v89
    %v100 = vperm.slane %v85, %v89
    %v101 = vsel %vm92, %v100, %v99
    %s103 = scalar_lea.vmem [#allocation7], 2
    %104 = vst.msk [vmem:[%s103] sm:$0x3] %vm95, %v101
    %v105 = vmax.f32 %v69, %v84
    %v106 = vmax.f32 %v70, %v85
    %v107 = vmax.f32 %v105, %v106
    %v108 = vrot.slane %v107, 4
    %v109 = vmax.f32 %v107, %v108
    %v110 = vrot.slane %v109, 2
    %v111 = vmax.f32 %v109, %v110
    %v112 = vrot.slane %v111, 1
    %v113 = vmax.f32 %v111, %v112
    %s114 = vtos %v113
    %v115 = vmin.f32 %v69, %v84
    %v116 = vmin.f32 %v70, %v85
    %v117 = vmin.f32 %v115, %v116
    %v118 = vrot.slane %v117, 4
    %v119 = vmin.f32 %v117, %v118
    %v120 = vrot.slane %v119, 2
    %v121 = vmin.f32 %v119, %v120
    %v122 = vrot.slane %v121, 1
    %v123 = vmin.f32 %v121, %v122
    %s124 = vtos %v123
    %v125 = vstv %s114
    %vm126 = vcmask 0
    %127 = vst.msk [vmem:[#allocation8] sm:$0x1] %vm126, %v125
    %v128 = vstv %s124
    %129 = vst.msk [vmem:[#allocation10] sm:$0x1] %vm126, %v128
    // Predicated region
    $region22: #{tpu_custom_call.1} parent=1 // pred_check
      _
    $region23: #{tpu_custom_call.1} parent=1 // pred_check_branch
      %131 = sbr.rel (0) target = $region25
    $region24: #{tpu_custom_call.1} parent=1 // pred_region
      %133 = vsyncadd [#allocation4], 0
      %s134 = sshll.u32 [#allocation7], 4
      %s135 = int_to_ptr.vmem [resolvable:$true] %s134
      %s136 = sshll.u32 %s3, 4
      %s137 = int_to_ptr.hbm [resolvable:$true] %s136
      %142 = dma.vmem_to_hbm [thread:$0]  %s135, 64, %s137, [#allocation4], 32, 32, 2
    $region25: #{tpu_custom_call.1} parent=1 // pred_fallthru
      _
    // Predicated region
    $region26: #{tpu_custom_call.1} parent=1 // pred_check
      _
    $region27: #{tpu_custom_call.1} parent=1 // pred_check_branch
      %144 = sbr.rel (0) target = $region29
    $region28: #{tpu_custom_call.1} parent=1 // pred_region
      %146 = vsyncadd [#allocation9], 0
      %s148 = sshll.u32 [#allocation8], 4
      %s149 = int_to_ptr.vmem [resolvable:$true] %s148
      %s150 = sshll.u32 %s4, 4
      %s151 = int_to_ptr.hbm [resolvable:$true] %s150
      %153 = dma.vmem_to_hbm [thread:$0]  %s149, 16, %s151, [#allocation9]
    $region29: #{tpu_custom_call.1} parent=1 // pred_fallthru
      _
    // Predicated region
    $region30: #{tpu_custom_call.1} parent=1 // pred_check
      _
    $region31: #{tpu_custom_call.1} parent=1 // pred_check_branch
      %155 = sbr.rel (0) target = $region33
    $region32: #{tpu_custom_call.1} parent=1 // pred_region
      %157 = vsyncadd [#allocation9], 0
      %s159 = sshll.u32 [#allocation10], 4
      %s160 = int_to_ptr.vmem [resolvable:$true] %s159
      %s161 = sshll.u32 %s5, 4
      %s162 = int_to_ptr.hbm [resolvable:$true] %s161
      %164 = dma.vmem_to_hbm [thread:$0]  %s160, 16, %s162, [#allocation9]
    $region33: #{tpu_custom_call.1} parent=1 // pred_fallthru
      _
    // Predicated region
    $region34: #{tpu_custom_call.1} parent=1 // pred_check
      _
    $region35: #{tpu_custom_call.1} parent=1 // pred_check_branch
      %166 = sbr.rel (0) target = $region37
    $region36: #{tpu_custom_call.1} parent=1 // pred_region
      %168 = dma.done [#allocation4], 64
    $region37: #{tpu_custom_call.1} parent=1 // pred_fallthru
      _
    // Predicated region
    $region38: #{tpu_custom_call.1} parent=1 // pred_check
      _
    $region39: #{tpu_custom_call.1} parent=1 // pred_check_branch
      %170 = sbr.rel (0) target = $region41
    $region40: #{tpu_custom_call.1} parent=1 // pred_region
      %172 = dma.done [#allocation9], 16
    $region41: #{tpu_custom_call.1} parent=1 // pred_fallthru
      _
    // Predicated region
    $region42: #{tpu_custom_call.1} parent=1 // pred_check
      _
    $region43: #{tpu_custom_call.1} parent=1 // pred_check_branch
      %174 = sbr.rel (0) target = $region45
    $region44: #{tpu_custom_call.1} parent=1 // pred_region
      %176 = dma.done [#allocation9], 16
    $region45: #{tpu_custom_call.1} parent=1 // pred_fallthru
      _
    %177 = vsyncpa [#allocation3], 1
    %178 = vsyncpa [#allocation6], 1
    %179 = vsyncpa [#allocation4], 1
    %180 = vsyncpa [#allocation9], 1

</llo_original>
